<compile_context>
chip_gen: v6e
topology: v6e:2x2x1
jax: 0.10.0
libtpu: 0.0.40
codegen_flags: <defaults>
</compile_context>

<pallas_src>
import jax
import jax.numpy as jnp
from jax import lax
from jax.experimental import pallas as pl
from jax.experimental.pallas import tpu as pltpu

INPUT_SIZE = 8
HIDDEN_DIM = 32
SEQ_LEN = 8


def lstm_pred_kernel(x_ref, wih_ref, whh_ref, b_ref, wout_ref, bout_ref,
                     out_ref):
    T = x_ref.shape[0]
    H = whh_ref.shape[0]

    # Hoist all operand loads out of the recurrence (tiny working set, no spill).
    w_hh = whh_ref[...]                                   # (H, 4H), g cols pre-scaled x2
    w_out = wout_ref[...]                                 # (1, H)
    b_out = bout_ref[...]                                 # (1, 1)

    # Input projection for ALL timesteps at once: one (T, D) @ (D, 4H) matmul,
    # off the serial dependency chain.  Gate order along 4H is [i, f, g, o];
    # g-gate columns (and bias) arrive pre-scaled by 2 from the wrapper.
    pre_gates = (jnp.dot(x_ref[...], wih_ref[...],
                         preferred_element_type=jnp.float32)
                 + b_ref[...])                            # (T, 4H) == one f32 vreg

    # Initial hidden state = zeros (matches init_hidden()); carried in vregs.
    h = jnp.zeros((1, H), jnp.float32)
    c = jnp.zeros((1, H), jnp.float32)

    hs = []
    # T is a small compile-time constant -> fully unrolled recurrence.
    for t in range(T):
        gates = pre_gates[t:t + 1, :] + jnp.dot(
            h, w_hh, preferred_element_type=jnp.float32)  # (1, 4H)
        # Single EUP pass over all 128 gate lanes.  Because the g-gate
        # pre-activation was scaled by 2 upstream, tanh(g_raw) == 2*sig - 1.
        sig_all = jax.nn.sigmoid(gates)
        i_g = sig_all[:, 0 * H:1 * H]
        f_g = sig_all[:, 1 * H:2 * H]
        g_g = 2.0 * sig_all[:, 2 * H:3 * H] - 1.0         # VPU fma, no 2nd EUP pass
        o_g = sig_all[:, 3 * H:4 * H]
        c = f_g * c + i_g * g_g
        h = o_g * jnp.tanh(c)                             # 2nd (last) EUP pass / step
        hs.append(h)                                      # stays in vregs

    hs_all = jnp.concatenate(hs, axis=0)                  # (T, H), no VMEM round-trip

    # hidden2out: output width is 1, so skip the MXU entirely.  VPU multiply
    # against broadcast w_out + XLU lane reduce (both in otherwise-idle slots
    # at the kernel tail), then one small store.
    out_ref[...] = jnp.sum(hs_all * w_out, axis=-1, keepdims=True) + b_out


def lstm_pred(x, w_ih_t, w_hh_t, bias, w_out, b_out):
    """x: (T, D); w_ih_t: (D, 4H); w_hh_t: (H, 4H); bias: (1, 4H);
    w_out: (1, H); b_out: (1, 1).  Returns (T, 1)."""
    T, D = x.shape
    H = w_hh_t.shape[0]

    # Pre-scale ONLY the g-gate (cell candidate) columns [2H:3H) by 2 so the
    # kernel can recover tanh(g) as 2*sigmoid(2g) - 1 with a single sigmoid
    # over the whole 4H gate vector.  i/f/o columns are untouched.
    g_scale = jnp.concatenate([
        jnp.ones((2 * H,), jnp.float32),
        jnp.full((H,), 2.0, jnp.float32),
        jnp.ones((H,), jnp.float32),
    ])[None, :]                                           # (1, 4H)
    w_ih_s = w_ih_t * g_scale
    w_hh_s = w_hh_t * g_scale
    bias_s = bias * g_scale

    vmem_spec = pl.BlockSpec(memory_space=pltpu.MemorySpace.VMEM)
    return pl.pallas_call(
        lstm_pred_kernel,
        out_shape=jax.ShapeDtypeStruct((T, 1), jnp.float32),
        in_specs=[vmem_spec] * 6,
        out_specs=vmem_spec,
    )(x, w_ih_s, w_hh_s, bias_s, w_out, b_out)


def reference_lstm_pred(x, w_ih_t, w_hh_t, bias, w_out, b_out):
    """Pure-JAX reference (same math as torch nn.LSTM + Linear, batch=1),
    using the UNSCALED weights."""
    H = w_hh_t.shape[0]

    def step(carry, x_t):
        h, c = carry
        gates = x_t[None, :] @ w_ih_t + h @ w_hh_t + bias
        i = jax.nn.sigmoid(gates[:, 0 * H:1 * H])
        f = jax.nn.sigmoid(gates[:, 1 * H:2 * H])
        g = jnp.tanh(gates[:, 2 * H:3 * H])
        o = jax.nn.sigmoid(gates[:, 3 * H:4 * H])
        c = f * c + i * g
        h = o * jnp.tanh(c)
        return (h, c), (h @ w_out.T + b_out)[0]

    h0 = jnp.zeros((1, H), jnp.float32)
    c0 = jnp.zeros((1, H), jnp.float32)
    _, outs = lax.scan(step, (h0, c0), x)
    return outs


if __name__ == "__main__":
    key = jax.random.PRNGKey(0)
    k_x, k_wih, k_whh, k_bih, k_bhh, k_wout, k_bout = jax.random.split(key, 7)

    D, H, T = INPUT_SIZE, HIDDEN_DIM, SEQ_LEN
    bound = 1.0 / jnp.sqrt(H)

    # deterministic "PyTorch-style" uniform(-1/sqrt(H), 1/sqrt(H)) init
    w_ih = jax.random.uniform(k_wih, (4 * H, D), jnp.float32, -bound, bound)
    w_hh = jax.random.uniform(k_whh, (4 * H, H), jnp.float32, -bound, bound)
    b_ih = jax.random.uniform(k_bih, (4 * H,), jnp.float32, -bound, bound)
    b_hh = jax.random.uniform(k_bhh, (4 * H,), jnp.float32, -bound, bound)
    w_out = jax.random.uniform(k_wout, (1, H), jnp.float32, -bound, bound)
    b_out = jax.random.uniform(k_bout, (1,), jnp.float32, -bound, bound)

    # pre-transpose / fuse biases (glue in plain JAX)
    w_ih_t = w_ih.T                         # (D, 4H)
    w_hh_t = w_hh.T                         # (H, 4H)
    bias = (b_ih + b_hh)[None, :]           # (1, 4H)
    b_out2 = b_out[None, :]                 # (1, 1)

    # input sequence: (T, input_size)  -- corresponds to seq.view(T, 1, -1)
    x = jax.random.normal(k_x, (T, D), jnp.float32)

    out = lstm_pred(x, w_ih_t, w_hh_t, bias, w_out, b_out2)
    out = jax.block_until_ready(out)

    ref = reference_lstm_pred(x, w_ih_t, w_hh_t, bias, w_out, b_out2)
    assert out.shape == (T, 1)
    assert jnp.allclose(out, ref, atol=1e-5, rtol=1e-5), (out, ref)

    print("KERNEL_OK")
</pallas_src>

<mosaic_0001>
module attributes {stable_mosaic.version = 11 : i64} {
  func.func @lstm_pred_kernel(%arg0: memref<8x8xf32, #tpu.memory_space<vmem>>, %arg1: memref<8x128xf32, #tpu.memory_space<vmem>>, %arg2: memref<32x128xf32, #tpu.memory_space<vmem>>, %arg3: memref<1x128xf32, #tpu.memory_space<vmem>>, %arg4: memref<1x32xf32, #tpu.memory_space<vmem>>, %arg5: memref<1x1xf32, #tpu.memory_space<vmem>>, %arg6: memref<8x1xf32, #tpu.memory_space<vmem>>) attributes {dimension_semantics = [], scalar_prefetch = 0 : i64, scratch_operands = 0 : i64, tpu.core_type = #tpu.core_type<tc>} {
    %c0 = arith.constant 0 : index
    %c0_0 = arith.constant 0 : index
    %0 = vector.load %arg2[%c0, %c0_0] : memref<32x128xf32, #tpu.memory_space<vmem>>, vector<32x128xf32>
    %c0_1 = arith.constant 0 : index
    %c0_2 = arith.constant 0 : index
    %1 = vector.load %arg4[%c0_1, %c0_2] : memref<1x32xf32, #tpu.memory_space<vmem>>, vector<1x32xf32>
    %c0_3 = arith.constant 0 : index
    %c0_4 = arith.constant 0 : index
    %2 = vector.load %arg5[%c0_3, %c0_4] : memref<1x1xf32, #tpu.memory_space<vmem>>, vector<1x1xf32>
    %c0_5 = arith.constant 0 : index
    %c0_6 = arith.constant 0 : index
    %3 = vector.load %arg0[%c0_5, %c0_6] : memref<8x8xf32, #tpu.memory_space<vmem>>, vector<8x8xf32>
    %c0_7 = arith.constant 0 : index
    %c0_8 = arith.constant 0 : index
    %4 = vector.load %arg1[%c0_7, %c0_8] : memref<8x128xf32, #tpu.memory_space<vmem>>, vector<8x128xf32>
    %cst = arith.constant dense<0.000000e+00> : vector<8x128xf32>
    %5 = tpu.matmul %3, %4, %cst {dimension_numbers = #tpu.dot_dimension_numbers<[1], [0], [0], [1], [0, 0, 1, 1], [], []>} : vector<8x8xf32>, vector<8x128xf32>, vector<8x128xf32> -> vector<8x128xf32>
    %c0_9 = arith.constant 0 : index
    %c0_10 = arith.constant 0 : index
    %6 = vector.load %arg3[%c0_9, %c0_10] : memref<1x128xf32, #tpu.memory_space<vmem>>, vector<1x128xf32>
    %7 = vector.broadcast %6 : vector<1x128xf32> to vector<8x128xf32>
    %8 = arith.addf %5, %7 : vector<8x128xf32>
    %cst_11 = arith.constant 0.000000e+00 : f32
    %9 = vector.broadcast %cst_11 : f32 to vector<1x32xf32>
    %cst_12 = arith.constant 0.000000e+00 : f32
    %10 = vector.broadcast %cst_12 : f32 to vector<1x32xf32>
    %11 = vector.extract_strided_slice %8 {offsets = [0, 0], sizes = [1, 128], strides = [1, 1]} : vector<8x128xf32> to vector<1x128xf32>
    %cst_13 = arith.constant dense<0.000000e+00> : vector<1x128xf32>
    %12 = tpu.matmul %9, %0, %cst_13 {dimension_numbers = #tpu.dot_dimension_numbers<[1], [0], [0], [1], [0, 0, 1, 1], [], []>} : vector<1x32xf32>, vector<32x128xf32>, vector<1x128xf32> -> vector<1x128xf32>
    %13 = arith.addf %11, %12 : vector<1x128xf32>
    %14 = arith.negf %13 : vector<1x128xf32>
    %15 = math.exp %14 : vector<1x128xf32>
    %cst_14 = arith.constant 1.000000e+00 : f32
    %16 = vector.broadcast %cst_14 : f32 to vector<1x128xf32>
    %17 = arith.addf %16, %15 : vector<1x128xf32>
    %18 = arith.divf %16, %17 : vector<1x128xf32>
    %19 = vector.extract_strided_slice %18 {offsets = [0, 0], sizes = [1, 32], strides = [1, 1]} : vector<1x128xf32> to vector<1x32xf32>
    %20 = vector.extract_strided_slice %18 {offsets = [0, 32], sizes = [1, 32], strides = [1, 1]} : vector<1x128xf32> to vector<1x32xf32>
    %21 = vector.extract_strided_slice %18 {offsets = [0, 64], sizes = [1, 32], strides = [1, 1]} : vector<1x128xf32> to vector<1x32xf32>
    %cst_15 = arith.constant 2.000000e+00 : f32
    %22 = vector.broadcast %cst_15 : f32 to vector<1x32xf32>
    %23 = arith.mulf %22, %21 : vector<1x32xf32>
    %cst_16 = arith.constant 1.000000e+00 : f32
    %24 = vector.broadcast %cst_16 : f32 to vector<1x32xf32>
    %25 = arith.subf %23, %24 : vector<1x32xf32>
    %26 = vector.extract_strided_slice %18 {offsets = [0, 96], sizes = [1, 32], strides = [1, 1]} : vector<1x128xf32> to vector<1x32xf32>
    %27 = arith.mulf %20, %10 : vector<1x32xf32>
    %28 = arith.mulf %19, %25 : vector<1x32xf32>
    %29 = arith.addf %27, %28 : vector<1x32xf32>
    %30 = math.tanh %29 : vector<1x32xf32>
    %31 = arith.mulf %26, %30 : vector<1x32xf32>
    %32 = vector.extract_strided_slice %8 {offsets = [1, 0], sizes = [1, 128], strides = [1, 1]} : vector<8x128xf32> to vector<1x128xf32>
    %cst_17 = arith.constant dense<0.000000e+00> : vector<1x128xf32>
    %33 = tpu.matmul %31, %0, %cst_17 {dimension_numbers = #tpu.dot_dimension_numbers<[1], [0], [0], [1], [0, 0, 1, 1], [], []>} : vector<1x32xf32>, vector<32x128xf32>, vector<1x128xf32> -> vector<1x128xf32>
    %34 = arith.addf %32, %33 : vector<1x128xf32>
    %35 = arith.negf %34 : vector<1x128xf32>
    %36 = math.exp %35 : vector<1x128xf32>
    %cst_18 = arith.constant 1.000000e+00 : f32
    %37 = vector.broadcast %cst_18 : f32 to vector<1x128xf32>
    %38 = arith.addf %37, %36 : vector<1x128xf32>
    %39 = arith.divf %37, %38 : vector<1x128xf32>
    %40 = vector.extract_strided_slice %39 {offsets = [0, 0], sizes = [1, 32], strides = [1, 1]} : vector<1x128xf32> to vector<1x32xf32>
    %41 = vector.extract_strided_slice %39 {offsets = [0, 32], sizes = [1, 32], strides = [1, 1]} : vector<1x128xf32> to vector<1x32xf32>
    %42 = vector.extract_strided_slice %39 {offsets = [0, 64], sizes = [1, 32], strides = [1, 1]} : vector<1x128xf32> to vector<1x32xf32>
    %cst_19 = arith.constant 2.000000e+00 : f32
    %43 = vector.broadcast %cst_19 : f32 to vector<1x32xf32>
    %44 = arith.mulf %43, %42 : vector<1x32xf32>
    %cst_20 = arith.constant 1.000000e+00 : f32
    %45 = vector.broadcast %cst_20 : f32 to vector<1x32xf32>
    %46 = arith.subf %44, %45 : vector<1x32xf32>
    %47 = vector.extract_strided_slice %39 {offsets = [0, 96], sizes = [1, 32], strides = [1, 1]} : vector<1x128xf32> to vector<1x32xf32>
    %48 = arith.mulf %41, %29 : vector<1x32xf32>
    %49 = arith.mulf %40, %46 : vector<1x32xf32>
    %50 = arith.addf %48, %49 : vector<1x32xf32>
    %51 = math.tanh %50 : vector<1x32xf32>
    %52 = arith.mulf %47, %51 : vector<1x32xf32>
    %53 = vector.extract_strided_slice %8 {offsets = [2, 0], sizes = [1, 128], strides = [1, 1]} : vector<8x128xf32> to vector<1x128xf32>
    %cst_21 = arith.constant dense<0.000000e+00> : vector<1x128xf32>
    %54 = tpu.matmul %52, %0, %cst_21 {dimension_numbers = #tpu.dot_dimension_numbers<[1], [0], [0], [1], [0, 0, 1, 1], [], []>} : vector<1x32xf32>, vector<32x128xf32>, vector<1x128xf32> -> vector<1x128xf32>
    %55 = arith.addf %53, %54 : vector<1x128xf32>
    %56 = arith.negf %55 : vector<1x128xf32>
    %57 = math.exp %56 : vector<1x128xf32>
    %cst_22 = arith.constant 1.000000e+00 : f32
    %58 = vector.broadcast %cst_22 : f32 to vector<1x128xf32>
    %59 = arith.addf %58, %57 : vector<1x128xf32>
    %60 = arith.divf %58, %59 : vector<1x128xf32>
    %61 = vector.extract_strided_slice %60 {offsets = [0, 0], sizes = [1, 32], strides = [1, 1]} : vector<1x128xf32> to vector<1x32xf32>
    %62 = vector.extract_strided_slice %60 {offsets = [0, 32], sizes = [1, 32], strides = [1, 1]} : vector<1x128xf32> to vector<1x32xf32>
    %63 = vector.extract_strided_slice %60 {offsets = [0, 64], sizes = [1, 32], strides = [1, 1]} : vector<1x128xf32> to vector<1x32xf32>
    %cst_23 = arith.constant 2.000000e+00 : f32
    %64 = vector.broadcast %cst_23 : f32 to vector<1x32xf32>
    %65 = arith.mulf %64, %63 : vector<1x32xf32>
    %cst_24 = arith.constant 1.000000e+00 : f32
    %66 = vector.broadcast %cst_24 : f32 to vector<1x32xf32>
    %67 = arith.subf %65, %66 : vector<1x32xf32>
    %68 = vector.extract_strided_slice %60 {offsets = [0, 96], sizes = [1, 32], strides = [1, 1]} : vector<1x128xf32> to vector<1x32xf32>
    %69 = arith.mulf %62, %50 : vector<1x32xf32>
    %70 = arith.mulf %61, %67 : vector<1x32xf32>
    %71 = arith.addf %69, %70 : vector<1x32xf32>
    %72 = math.tanh %71 : vector<1x32xf32>
    %73 = arith.mulf %68, %72 : vector<1x32xf32>
    %74 = vector.extract_strided_slice %8 {offsets = [3, 0], sizes = [1, 128], strides = [1, 1]} : vector<8x128xf32> to vector<1x128xf32>
    %cst_25 = arith.constant dense<0.000000e+00> : vector<1x128xf32>
    %75 = tpu.matmul %73, %0, %cst_25 {dimension_numbers = #tpu.dot_dimension_numbers<[1], [0], [0], [1], [0, 0, 1, 1], [], []>} : vector<1x32xf32>, vector<32x128xf32>, vector<1x128xf32> -> vector<1x128xf32>
    %76 = arith.addf %74, %75 : vector<1x128xf32>
    %77 = arith.negf %76 : vector<1x128xf32>
    %78 = math.exp %77 : vector<1x128xf32>
    %cst_26 = arith.constant 1.000000e+00 : f32
    %79 = vector.broadcast %cst_26 : f32 to vector<1x128xf32>
    %80 = arith.addf %79, %78 : vector<1x128xf32>
    %81 = arith.divf %79, %80 : vector<1x128xf32>
    %82 = vector.extract_strided_slice %81 {offsets = [0, 0], sizes = [1, 32], strides = [1, 1]} : vector<1x128xf32> to vector<1x32xf32>
    %83 = vector.extract_strided_slice %81 {offsets = [0, 32], sizes = [1, 32], strides = [1, 1]} : vector<1x128xf32> to vector<1x32xf32>
    %84 = vector.extract_strided_slice %81 {offsets = [0, 64], sizes = [1, 32], strides = [1, 1]} : vector<1x128xf32> to vector<1x32xf32>
    %cst_27 = arith.constant 2.000000e+00 : f32
    %85 = vector.broadcast %cst_27 : f32 to vector<1x32xf32>
    %86 = arith.mulf %85, %84 : vector<1x32xf32>
    %cst_28 = arith.constant 1.000000e+00 : f32
    %87 = vector.broadcast %cst_28 : f32 to vector<1x32xf32>
    %88 = arith.subf %86, %87 : vector<1x32xf32>
    %89 = vector.extract_strided_slice %81 {offsets = [0, 96], sizes = [1, 32], strides = [1, 1]} : vector<1x128xf32> to vector<1x32xf32>
    %90 = arith.mulf %83, %71 : vector<1x32xf32>
    %91 = arith.mulf %82, %88 : vector<1x32xf32>
    %92 = arith.addf %90, %91 : vector<1x32xf32>
    %93 = math.tanh %92 : vector<1x32xf32>
    %94 = arith.mulf %89, %93 : vector<1x32xf32>
    %95 = vector.extract_strided_slice %8 {offsets = [4, 0], sizes = [1, 128], strides = [1, 1]} : vector<8x128xf32> to vector<1x128xf32>
    %cst_29 = arith.constant dense<0.000000e+00> : vector<1x128xf32>
    %96 = tpu.matmul %94, %0, %cst_29 {dimension_numbers = #tpu.dot_dimension_numbers<[1], [0], [0], [1], [0, 0, 1, 1], [], []>} : vector<1x32xf32>, vector<32x128xf32>, vector<1x128xf32> -> vector<1x128xf32>
    %97 = arith.addf %95, %96 : vector<1x128xf32>
    %98 = arith.negf %97 : vector<1x128xf32>
    %99 = math.exp %98 : vector<1x128xf32>
    %cst_30 = arith.constant 1.000000e+00 : f32
    %100 = vector.broadcast %cst_30 : f32 to vector<1x128xf32>
    %101 = arith.addf %100, %99 : vector<1x128xf32>
    %102 = arith.divf %100, %101 : vector<1x128xf32>
    %103 = vector.extract_strided_slice %102 {offsets = [0, 0], sizes = [1, 32], strides = [1, 1]} : vector<1x128xf32> to vector<1x32xf32>
    %104 = vector.extract_strided_slice %102 {offsets = [0, 32], sizes = [1, 32], strides = [1, 1]} : vector<1x128xf32> to vector<1x32xf32>
    %105 = vector.extract_strided_slice %102 {offsets = [0, 64], sizes = [1, 32], strides = [1, 1]} : vector<1x128xf32> to vector<1x32xf32>
    %cst_31 = arith.constant 2.000000e+00 : f32
    %106 = vector.broadcast %cst_31 : f32 to vector<1x32xf32>
    %107 = arith.mulf %106, %105 : vector<1x32xf32>
    %cst_32 = arith.constant 1.000000e+00 : f32
    %108 = vector.broadcast %cst_32 : f32 to vector<1x32xf32>
    %109 = arith.subf %107, %108 : vector<1x32xf32>
    %110 = vector.extract_strided_slice %102 {offsets = [0, 96], sizes = [1, 32], strides = [1, 1]} : vector<1x128xf32> to vector<1x32xf32>
    %111 = arith.mulf %104, %92 : vector<1x32xf32>
    %112 = arith.mulf %103, %109 : vector<1x32xf32>
    %113 = arith.addf %111, %112 : vector<1x32xf32>
    %114 = math.tanh %113 : vector<1x32xf32>
    %115 = arith.mulf %110, %114 : vector<1x32xf32>
    %116 = vector.extract_strided_slice %8 {offsets = [5, 0], sizes = [1, 128], strides = [1, 1]} : vector<8x128xf32> to vector<1x128xf32>
    %cst_33 = arith.constant dense<0.000000e+00> : vector<1x128xf32>
    %117 = tpu.matmul %115, %0, %cst_33 {dimension_numbers = #tpu.dot_dimension_numbers<[1], [0], [0], [1], [0, 0, 1, 1], [], []>} : vector<1x32xf32>, vector<32x128xf32>, vector<1x128xf32> -> vector<1x128xf32>
    %118 = arith.addf %116, %117 : vector<1x128xf32>
    %119 = arith.negf %118 : vector<1x128xf32>
    %120 = math.exp %119 : vector<1x128xf32>
    %cst_34 = arith.constant 1.000000e+00 : f32
    %121 = vector.broadcast %cst_34 : f32 to vector<1x128xf32>
    %122 = arith.addf %121, %120 : vector<1x128xf32>
    %123 = arith.divf %121, %122 : vector<1x128xf32>
    %124 = vector.extract_strided_slice %123 {offsets = [0, 0], sizes = [1, 32], strides = [1, 1]} : vector<1x128xf32> to vector<1x32xf32>
    %125 = vector.extract_strided_slice %123 {offsets = [0, 32], sizes = [1, 32], strides = [1, 1]} : vector<1x128xf32> to vector<1x32xf32>
    %126 = vector.extract_strided_slice %123 {offsets = [0, 64], sizes = [1, 32], strides = [1, 1]} : vector<1x128xf32> to vector<1x32xf32>
    %cst_35 = arith.constant 2.000000e+00 : f32
    %127 = vector.broadcast %cst_35 : f32 to vector<1x32xf32>
    %128 = arith.mulf %127, %126 : vector<1x32xf32>
    %cst_36 = arith.constant 1.000000e+00 : f32
    %129 = vector.broadcast %cst_36 : f32 to vector<1x32xf32>
    %130 = arith.subf %128, %129 : vector<1x32xf32>
    %131 = vector.extract_strided_slice %123 {offsets = [0, 96], sizes = [1, 32], strides = [1, 1]} : vector<1x128xf32> to vector<1x32xf32>
    %132 = arith.mulf %125, %113 : vector<1x32xf32>
    %133 = arith.mulf %124, %130 : vector<1x32xf32>
    %134 = arith.addf %132, %133 : vector<1x32xf32>
    %135 = math.tanh %134 : vector<1x32xf32>
    %136 = arith.mulf %131, %135 : vector<1x32xf32>
    %137 = vector.extract_strided_slice %8 {offsets = [6, 0], sizes = [1, 128], strides = [1, 1]} : vector<8x128xf32> to vector<1x128xf32>
    %cst_37 = arith.constant dense<0.000000e+00> : vector<1x128xf32>
    %138 = tpu.matmul %136, %0, %cst_37 {dimension_numbers = #tpu.dot_dimension_numbers<[1], [0], [0], [1], [0, 0, 1, 1], [], []>} : vector<1x32xf32>, vector<32x128xf32>, vector<1x128xf32> -> vector<1x128xf32>
    %139 = arith.addf %137, %138 : vector<1x128xf32>
    %140 = arith.negf %139 : vector<1x128xf32>
    %141 = math.exp %140 : vector<1x128xf32>
    %cst_38 = arith.constant 1.000000e+00 : f32
    %142 = vector.broadcast %cst_38 : f32 to vector<1x128xf32>
    %143 = arith.addf %142, %141 : vector<1x128xf32>
    %144 = arith.divf %142, %143 : vector<1x128xf32>
    %145 = vector.extract_strided_slice %144 {offsets = [0, 0], sizes = [1, 32], strides = [1, 1]} : vector<1x128xf32> to vector<1x32xf32>
    %146 = vector.extract_strided_slice %144 {offsets = [0, 32], sizes = [1, 32], strides = [1, 1]} : vector<1x128xf32> to vector<1x32xf32>
    %147 = vector.extract_strided_slice %144 {offsets = [0, 64], sizes = [1, 32], strides = [1, 1]} : vector<1x128xf32> to vector<1x32xf32>
    %cst_39 = arith.constant 2.000000e+00 : f32
    %148 = vector.broadcast %cst_39 : f32 to vector<1x32xf32>
    %149 = arith.mulf %148, %147 : vector<1x32xf32>
    %cst_40 = arith.constant 1.000000e+00 : f32
    %150 = vector.broadcast %cst_40 : f32 to vector<1x32xf32>
    %151 = arith.subf %149, %150 : vector<1x32xf32>
    %152 = vector.extract_strided_slice %144 {offsets = [0, 96], sizes = [1, 32], strides = [1, 1]} : vector<1x128xf32> to vector<1x32xf32>
    %153 = arith.mulf %146, %134 : vector<1x32xf32>
    %154 = arith.mulf %145, %151 : vector<1x32xf32>
    %155 = arith.addf %153, %154 : vector<1x32xf32>
    %156 = math.tanh %155 : vector<1x32xf32>
    %157 = arith.mulf %152, %156 : vector<1x32xf32>
    %158 = vector.extract_strided_slice %8 {offsets = [7, 0], sizes = [1, 128], strides = [1, 1]} : vector<8x128xf32> to vector<1x128xf32>
    %cst_41 = arith.constant dense<0.000000e+00> : vector<1x128xf32>
    %159 = tpu.matmul %157, %0, %cst_41 {dimension_numbers = #tpu.dot_dimension_numbers<[1], [0], [0], [1], [0, 0, 1, 1], [], []>} : vector<1x32xf32>, vector<32x128xf32>, vector<1x128xf32> -> vector<1x128xf32>
    %160 = arith.addf %158, %159 : vector<1x128xf32>
    %161 = arith.negf %160 : vector<1x128xf32>
    %162 = math.exp %161 : vector<1x128xf32>
    %cst_42 = arith.constant 1.000000e+00 : f32
    %163 = vector.broadcast %cst_42 : f32 to vector<1x128xf32>
    %164 = arith.addf %163, %162 : vector<1x128xf32>
    %165 = arith.divf %163, %164 : vector<1x128xf32>
    %166 = vector.extract_strided_slice %165 {offsets = [0, 0], sizes = [1, 32], strides = [1, 1]} : vector<1x128xf32> to vector<1x32xf32>
    %167 = vector.extract_strided_slice %165 {offsets = [0, 32], sizes = [1, 32], strides = [1, 1]} : vector<1x128xf32> to vector<1x32xf32>
    %168 = vector.extract_strided_slice %165 {offsets = [0, 64], sizes = [1, 32], strides = [1, 1]} : vector<1x128xf32> to vector<1x32xf32>
    %cst_43 = arith.constant 2.000000e+00 : f32
    %169 = vector.broadcast %cst_43 : f32 to vector<1x32xf32>
    %170 = arith.mulf %169, %168 : vector<1x32xf32>
    %cst_44 = arith.constant 1.000000e+00 : f32
    %171 = vector.broadcast %cst_44 : f32 to vector<1x32xf32>
    %172 = arith.subf %170, %171 : vector<1x32xf32>
    %173 = vector.extract_strided_slice %165 {offsets = [0, 96], sizes = [1, 32], strides = [1, 1]} : vector<1x128xf32> to vector<1x32xf32>
    %174 = arith.mulf %167, %155 : vector<1x32xf32>
    %175 = arith.mulf %166, %172 : vector<1x32xf32>
    %176 = arith.addf %174, %175 : vector<1x32xf32>
    %177 = math.tanh %176 : vector<1x32xf32>
    %178 = arith.mulf %173, %177 : vector<1x32xf32>
    %179 = tpu.concatenate %31, %52, %73, %94, %115, %136, %157, %178 in 0 : vector<1x32xf32>, vector<1x32xf32>, vector<1x32xf32>, vector<1x32xf32>, vector<1x32xf32>, vector<1x32xf32>, vector<1x32xf32>, vector<1x32xf32> -> vector<8x32xf32>
    %180 = vector.broadcast %1 : vector<1x32xf32> to vector<8x32xf32>
    %181 = arith.mulf %179, %180 : vector<8x32xf32>
    %cst_45 = arith.constant dense<0.000000e+00> : vector<8xf32>
    %182 = vector.multi_reduction <add>, %181, %cst_45 [1] : vector<8x32xf32> to vector<8xf32>
    %183 = vector.shape_cast %182 : vector<8xf32> to vector<8x1xf32>
    %184 = vector.broadcast %2 : vector<1x1xf32> to vector<8x1xf32>
    %185 = arith.addf %183, %184 : vector<8x1xf32>
    %c0_46 = arith.constant 0 : index
    %c0_47 = arith.constant 0 : index
    %186 = vector.load %arg6[%c0_46, %c0_47] : memref<8x1xf32, #tpu.memory_space<vmem>>, vector<8x1xf32>
    tpu.vector_store %arg6[%c0_46, %c0_47], %185 {strides = array<i32>} : memref<8x1xf32, #tpu.memory_space<vmem>>, vector<8x1xf32>,
    return
  }
}

</mosaic_0001>

<llo_original>
// kernel: tpu_custom_call.1
$region0: #{tpu_custom_call.1}
  #allocation0 [shape = 'u32[]', space=smem, size = 0x4, offset = 0x4, fixed_abs, tag = 'smem constant byte address 0x4 - core index']
  #allocation1 [shape = 'u32[144,128]{1,0:T(1,128)}', space=vmem, size = 0x12000, scoped, tag = 'internal scratch']
  #allocation2 [shape = 'f32[1,1]{1,0:T(1,128)S(1)}', space=vmem, size = 0x200, scoped, tag = 'scoped memory for tpu_custom_call.1']
  %s0 = inlined_call_operand.hbm [shape: f32[8,8], index: 0, kind: input, shape index: {}]
  %s1 = inlined_call_operand.hbm [shape: f32[8,128], index: 1, kind: input, shape index: {}]
  %s2 = inlined_call_operand.hbm [shape: f32[32,128], index: 2, kind: input, shape index: {}]
  %s3 = inlined_call_operand.vmem [shape: f32[1,128], index: 3, kind: input, shape index: {}]
  %s4 = inlined_call_operand.vmem [shape: f32[1,32], index: 4, kind: input, shape index: {}]
  %s5 = inlined_call_operand.<no memory space> [shape: f32[1,1], index: 5, kind: input, shape index: {}]
  %s6 = inlined_call_operand.vmem [shape: f32[8,1], index: 6, kind: output, shape index: {}]
  %s7 = sld [smem:[#allocation0]]
  $region46: #{tpu_custom_call.1} parent=0
    _
  %s9 = ssub.s32 1, %s7
  %s10 = scalar_select 0, %s9, %s7
  %v11 = vstv %s5
  %12 = vst [vmem:[#allocation2] sm:$0x1] %v11
  $region1: #{tpu_custom_call.1} parent=0
    #allocation3 [shape = 'u8[4096]{0}', space=vmem, size = 0x1000, scoped, tag = 'input window, operand 0, single buffered']
    #allocation4 [shape = 's32[1]{0}', space=sflag, size = 0x4, scoped, tag = 'scoped memory for tpu_custom_call.1']
    #allocation5 [shape = 'u8[4096]{0}', space=vmem, size = 0x1000, scoped, tag = 'input window, operand 1, single buffered']
    #allocation6 [shape = 's32[1]{0}', space=sflag, size = 0x4, scoped, tag = 'scoped memory for tpu_custom_call.1']
    #allocation7 [shape = 'u8[16384]{0}', space=vmem, size = 0x4000, scoped, tag = 'input window, operand 2, single buffered']
    %13 = vsyncpa [#allocation4], 0
    %14 = vsyncpa [#allocation6], 0
    // Predicated region
    $region2: #{tpu_custom_call.1} parent=1 // pred_check
      _
    $region3: #{tpu_custom_call.1} parent=1 // pred_check_branch
      %16 = sbr.rel (0) target = $region5
    $region4: #{tpu_custom_call.1} parent=1 // pred_region
      %s18 = ssub.s32 128, 128
      %19 = vsyncadd [#allocation4], %s18
      %s21 = sshll.u32 [#allocation3], 4
      %s22 = int_to_ptr.vmem [resolvable:$true] %s21
      %24 = dma.hbm_to_vmem [thread:$0]  %s0, 128, %s22, [#allocation4]
    $region5: #{tpu_custom_call.1} parent=1 // pred_fallthru
      _
    // Predicated region
    $region6: #{tpu_custom_call.1} parent=1 // pred_check
      _
    $region7: #{tpu_custom_call.1} parent=1 // pred_check_branch
      %26 = sbr.rel (0) target = $region9
    $region8: #{tpu_custom_call.1} parent=1 // pred_region
      %s28 = ssub.s32 128, 128
      %29 = vsyncadd [#allocation6], %s28
      %s31 = sshll.u32 [#allocation5], 4
      %s32 = int_to_ptr.vmem [resolvable:$true] %s31
      %34 = dma.hbm_to_vmem [thread:$0]  %s1, 128, %s32, [#allocation6]
    $region9: #{tpu_custom_call.1} parent=1 // pred_fallthru
      _
    // Predicated region
    $region10: #{tpu_custom_call.1} parent=1 // pred_check
      _
    $region11: #{tpu_custom_call.1} parent=1 // pred_check_branch
      %36 = sbr.rel (0) target = $region13
    $region12: #{tpu_custom_call.1} parent=1 // pred_region
      %s38 = ssub.s32 512, 512
      %39 = vsyncadd [#allocation6], %s38
      %s40 = sshll.u32 [#allocation7], 4
      %s41 = int_to_ptr.vmem [resolvable:$true] %s40
      %46 = dma.hbm_to_vmem [thread:$0]  %s2, 512, %s41, [#allocation6], 128, 128, 8
    $region13: #{tpu_custom_call.1} parent=1 // pred_fallthru
      _
    // Predicated region
    $region14: #{tpu_custom_call.1} parent=1 // pred_check
      _
    $region15: #{tpu_custom_call.1} parent=1 // pred_check_branch
      %48 = sbr.rel (0) target = $region17
    $region16: #{tpu_custom_call.1} parent=1 // pred_region
      _
    $region17: #{tpu_custom_call.1} parent=1 // pred_fallthru
      _
    // Predicated region
    $region18: #{tpu_custom_call.1} parent=1 // pred_check
      _
    $region19: #{tpu_custom_call.1} parent=1 // pred_check_branch
      %50 = sbr.rel (0) target = $region21
    $region20: #{tpu_custom_call.1} parent=1 // pred_region
      _
    $region21: #{tpu_custom_call.1} parent=1 // pred_fallthru
      _
    // Predicated region
    $region22: #{tpu_custom_call.1} parent=1 // pred_check
      _
    $region23: #{tpu_custom_call.1} parent=1 // pred_check_branch
      %52 = sbr.rel (0) target = $region25
    $region24: #{tpu_custom_call.1} parent=1 // pred_region
      _
    $region25: #{tpu_custom_call.1} parent=1 // pred_fallthru
      _
    // Predicated region
    $region26: #{tpu_custom_call.1} parent=1 // pred_check
      _
    $region27: #{tpu_custom_call.1} parent=1 // pred_check_branch
      %54 = sbr.rel (0) target = $region29
    $region28: #{tpu_custom_call.1} parent=1 // pred_region
      %55 = dma.done [#allocation4], 128
    $region29: #{tpu_custom_call.1} parent=1 // pred_fallthru
      _
    // Predicated region
    $region30: #{tpu_custom_call.1} parent=1 // pred_check
      _
    $region31: #{tpu_custom_call.1} parent=1 // pred_check_branch
      %57 = sbr.rel (0) target = $region33
    $region32: #{tpu_custom_call.1} parent=1 // pred_region
      %58 = dma.done [#allocation6], 128
    $region33: #{tpu_custom_call.1} parent=1 // pred_fallthru
      _
    // Predicated region
    $region34: #{tpu_custom_call.1} parent=1 // pred_check
      _
    $region35: #{tpu_custom_call.1} parent=1 // pred_check_branch
      %60 = sbr.rel (0) target = $region37
    $region36: #{tpu_custom_call.1} parent=1 // pred_region
      %61 = dma.done [#allocation6], 512
    $region37: #{tpu_custom_call.1} parent=1 // pred_fallthru
      _
    %v62 = vld [vmem:[#allocation7] sm:$0xff]
    %v63 = vld [vmem:[#allocation7 + $0x8] sm:$0xff]
    %v64 = vld [vmem:[#allocation7 + $0x10] sm:$0xff]
    %v65 = vld [vmem:[#allocation7 + $0x18] sm:$0xff]
    %v66 = vld [vmem:[%s4] sm:$0x1]
    %v67 = vld [vmem:[#allocation2] sm:$0x1]
    %v68 = vld [vmem:[#allocation3] sm:$0xff]
    %v69 = vld [vmem:[#allocation5] sm:$0xff]
    %v70 = vld [vmem:[%s3] sm:$0x1]
    %v72 = vlaneseq
    %v73 = vshrl.u32 %v72, 7
    %v74 = vsub.s32 0, %v73
    %v75 = vrot.slane %v70, %v74
    %vm77 = vcmask 64512
    %v79 = vsel %vm77, %v68, 0
    %81 = vmatprep.subr.mxu0 0.0
    %82 = vmatpush1.msra.mxu0 0.0
    %83 = vmatprep.subr.mxu0 0.0
    %84 = vmatpush1.msra.mxu0 0.0
    %85 = vmatprep.subr.mxu0 0.0
    %86 = vmatpush1.msra.mxu0 0.0
    %87 = vmatprep.subr.mxu0 0.0
    %88 = vmatpush1.msra.mxu0 0.0
    %89 = vmatprep.subr.mxu0 0.0
    %90 = vmatpush1.msra.mxu0 0.0
    %91 = vmatprep.subr.mxu0 0.0
    %92 = vmatpush1.msra.mxu0 0.0
    %93 = vmatprep.subr.mxu0 0.0
    %94 = vmatpush1.msra.mxu0 0.0
    %95 = vmatprep.subr.mxu0 0.0
    %96 = vmatpush1.msra.mxu0 0.0
    %97 = vmatprep.subr.mxu0 0.0
    %98 = vmatpush1.msra.mxu0 0.0
    %99 = vmatprep.subr.mxu0 0.0
    %100 = vmatpush1.msra.mxu0 0.0
    %101 = vmatprep.subr.mxu0 0.0
    %102 = vmatpush1.msra.mxu0 0.0
    %103 = vmatprep.subr.mxu0 0.0
    %104 = vmatpush1.msra.mxu0 0.0
    %105 = vmatprep.subr.mxu0 0.0
    %106 = vmatpush1.msra.mxu0 0.0
    %107 = vmatprep.subr.mxu0 0.0
    %108 = vmatpush1.msra.mxu0 0.0
    %109 = vmatprep.subr.mxu0 0.0
    %110 = vmatpush1.msra.mxu0 0.0
    %111 = vmatprep.subr.mxu0 0.0
    %112 = vmatpush1.msra.mxu0 %v69
    %113 = vmatprep.subr.mxu0 0.0
    %114 = vmatpush2.msra.mxu0 0.0
    %115 = vmatprep.subr.mxu0 0.0
    %116 = vmatpush2.msra.mxu0 0.0
    %117 = vmatprep.subr.mxu0 0.0
    %118 = vmatpush2.msra.mxu0 0.0
    %119 = vmatprep.subr.mxu0 0.0
    %120 = vmatpush2.msra.mxu0 0.0
    %121 = vmatprep.subr.mxu0 0.0
    %122 = vmatpush2.msra.mxu0 0.0
    %123 = vmatprep.subr.mxu0 0.0
    %124 = vmatpush2.msra.mxu0 0.0
    %125 = vmatprep.subr.mxu0 0.0
    %126 = vmatpush2.msra.mxu0 0.0
    %127 = vmatprep.subr.mxu0 0.0
    %128 = vmatpush2.msra.mxu0 0.0
    %129 = vmatprep.subr.mxu0 0.0
    %130 = vmatpush2.msra.mxu0 0.0
    %131 = vmatprep.subr.mxu0 0.0
    %132 = vmatpush2.msra.mxu0 0.0
    %133 = vmatprep.subr.mxu0 0.0
    %134 = vmatpush2.msra.mxu0 0.0
    %135 = vmatprep.subr.mxu0 0.0
    %136 = vmatpush2.msra.mxu0 0.0
    %137 = vmatprep.subr.mxu0 0.0
    %138 = vmatpush2.msra.mxu0 0.0
    %139 = vmatprep.subr.mxu0 0.0
    %140 = vmatpush2.msra.mxu0 0.0
    %141 = vmatprep.subr.mxu0 0.0
    %142 = vmatpush2.msra.mxu0 0.0
    %143 = vmatprep.subr.mxu0 0.0
    %144 = vmatpush2.msra.mxu0 0.0
    %145 = vmatprep.mubr.f32.mxu0 0.0
    %146 = vmatmul.mubr.f32.gmra.mxu0 %v79
    %v147 = vpop.f32.mrf.mxu0
    %v148 = vadd.f32 %v75, %v147
    %v149 = vpop.f32.mrf.mxu0
    %150 = vdwg.mxu0
    %vm151 = vcmask 261120
    %v153 = vsel %vm151, 0.0, 0
    %155 = vmatprep.subr.mxu0 0.0
    %156 = vmatpush1.msra.mxu0 0.0
    %157 = vmatprep.subr.mxu0 0.0
    %158 = vmatpush1.msra.mxu0 0.0
    %159 = vmatprep.subr.mxu0 0.0
    %160 = vmatpush1.msra.mxu0 0.0
    %161 = vmatprep.subr.mxu0 0.0
    %162 = vmatpush1.msra.mxu0 0.0
    %163 = vmatprep.subr.mxu0 0.0
    %164 = vmatpush1.msra.mxu0 0.0
    %165 = vmatprep.subr.mxu0 0.0
    %166 = vmatpush1.msra.mxu0 0.0
    %167 = vmatprep.subr.mxu0 0.0
    %168 = vmatpush1.msra.mxu0 0.0
    %169 = vmatprep.subr.mxu0 0.0
    %170 = vmatpush1.msra.mxu0 0.0
    %171 = vmatprep.subr.mxu0 0.0
    %172 = vmatpush1.msra.mxu0 0.0
    %173 = vmatprep.subr.mxu0 0.0
    %174 = vmatpush1.msra.mxu0 0.0
    %175 = vmatprep.subr.mxu0 0.0
    %176 = vmatpush1.msra.mxu0 0.0
    %177 = vmatprep.subr.mxu0 0.0
    %178 = vmatpush1.msra.mxu0 0.0
    %179 = vmatprep.subr.mxu0 0.0
    %180 = vmatpush1.msra.mxu0 %v65
    %181 = vmatprep.subr.mxu0 0.0
    %182 = vmatpush1.msra.mxu0 %v64
    %183 = vmatprep.subr.mxu0 0.0
    %184 = vmatpush1.msra.mxu0 %v63
    %185 = vmatprep.subr.mxu0 0.0
    %186 = vmatpush1.msra.mxu0 %v62
    %187 = vmatprep.subr.mxu0 0.0
    %188 = vmatpush2.msra.mxu0 0.0
    %189 = vmatprep.subr.mxu0 0.0
    %190 = vmatpush2.msra.mxu0 0.0
    %191 = vmatprep.subr.mxu0 0.0
    %192 = vmatpush2.msra.mxu0 0.0
    %193 = vmatprep.subr.mxu0 0.0
    %194 = vmatpush2.msra.mxu0 0.0
    %195 = vmatprep.subr.mxu0 0.0
    %196 = vmatpush2.msra.mxu0 0.0
    %197 = vmatprep.subr.mxu0 0.0
    %198 = vmatpush2.msra.mxu0 0.0
    %199 = vmatprep.subr.mxu0 0.0
    %200 = vmatpush2.msra.mxu0 0.0
    %201 = vmatprep.subr.mxu0 0.0
    %202 = vmatpush2.msra.mxu0 0.0
    %203 = vmatprep.subr.mxu0 0.0
    %204 = vmatpush2.msra.mxu0 0.0
    %205 = vmatprep.subr.mxu0 0.0
    %206 = vmatpush2.msra.mxu0 0.0
    %207 = vmatprep.subr.mxu0 0.0
    %208 = vmatpush2.msra.mxu0 0.0
    %209 = vmatprep.subr.mxu0 0.0
    %210 = vmatpush2.msra.mxu0 0.0
    %211 = vmatprep.subr.mxu0 0.0
    %212 = vmatpush2.msra.mxu0 0.0
    %213 = vmatprep.subr.mxu0 0.0
    %214 = vmatpush2.msra.mxu0 0.0
    %215 = vmatprep.subr.mxu0 0.0
    %216 = vmatpush2.msra.mxu0 0.0
    %217 = vmatprep.subr.mxu0 0.0
    %218 = vmatpush2.msra.mxu0 0.0
    %219 = vmatprep.mubr.f32.mxu0 0.0
    %220 = vmatmul.mubr.f32.gmra.mxu0 %v153
    %v221 = vpop.f32.mrf.mxu0
    %v222 = vadd.f32 0.0, %v221
    %v223 = vpop.f32.mrf.mxu0
    %224 = vdwg.mxu0
    %v225 = vadd.f32 %v148, %v222
    %v226 = vxor.u32 %v225, 2147483648
    %v227 = vmul.f32 %v226, 1.442695
    %v228 = vpow.pop %v227
    %v229 = vadd.f32 %v228, 1.0
    %v230 = vrcp.pop %v229
    %v231 = vmul.f32 1.0, %v230
    %v232 = vmul.f32 %v231, 2.0
    %v233 = vsub.f32 %v232, 1.0
    %v234 = vmul.f32 %v231, 0.0
    %236 = vrot.lane.b32.xlu0 %v233, 64
    %v237 = vpop.permute.xlu0 %236
    %v239 = vmul.f32 %v231, %v237
    %241 = vrot.lane.b32.xlu0 %v239, 32
    %v242 = vpop.permute.xlu0 %241
    %v244 = vadd.f32 %v234, %v242
    %v245 = vtanh.pop %v244
    %247 = vrot.lane.b32.xlu0 %v245, 64
    %v248 = vpop.permute.xlu0 %247
    %v250 = vmul.f32 %v231, %v248
    %252 = vrot.lane.b32.xlu0 %v250, 32
    %v253 = vpop.permute.xlu0 %252
    %v254 = vsel %vm151, %v253, 0
    %256 = vmatprep.subr.mxu0 0.0
    %257 = vmatpush1.msra.mxu0 0.0
    %258 = vmatprep.subr.mxu0 0.0
    %259 = vmatpush1.msra.mxu0 0.0
    %260 = vmatprep.subr.mxu0 0.0
    %261 = vmatpush1.msra.mxu0 0.0
    %262 = vmatprep.subr.mxu0 0.0
    %263 = vmatpush1.msra.mxu0 0.0
    %264 = vmatprep.subr.mxu0 0.0
    %265 = vmatpush1.msra.mxu0 0.0
    %266 = vmatprep.subr.mxu0 0.0
    %267 = vmatpush1.msra.mxu0 0.0
    %268 = vmatprep.subr.mxu0 0.0
    %269 = vmatpush1.msra.mxu0 0.0
    %270 = vmatprep.subr.mxu0 0.0
    %271 = vmatpush1.msra.mxu0 0.0
    %272 = vmatprep.subr.mxu0 0.0
    %273 = vmatpush1.msra.mxu0 0.0
    %274 = vmatprep.subr.mxu0 0.0
    %275 = vmatpush1.msra.mxu0 0.0
    %276 = vmatprep.subr.mxu0 0.0
    %277 = vmatpush1.msra.mxu0 0.0
    %278 = vmatprep.subr.mxu0 0.0
    %279 = vmatpush1.msra.mxu0 0.0
    %280 = vmatprep.subr.mxu0 0.0
    %281 = vmatpush1.msra.mxu0 %v65
    %282 = vmatprep.subr.mxu0 0.0
    %283 = vmatpush1.msra.mxu0 %v64
    %284 = vmatprep.subr.mxu0 0.0
    %285 = vmatpush1.msra.mxu0 %v63
    %286 = vmatprep.subr.mxu0 0.0
    %287 = vmatpush1.msra.mxu0 %v62
    %288 = vmatprep.subr.mxu0 0.0
    %289 = vmatpush2.msra.mxu0 0.0
    %290 = vmatprep.subr.mxu0 0.0
    %291 = vmatpush2.msra.mxu0 0.0
    %292 = vmatprep.subr.mxu0 0.0
    %293 = vmatpush2.msra.mxu0 0.0
    %294 = vmatprep.subr.mxu0 0.0
    %295 = vmatpush2.msra.mxu0 0.0
    %296 = vmatprep.subr.mxu0 0.0
    %297 = vmatpush2.msra.mxu0 0.0
    %298 = vmatprep.subr.mxu0 0.0
    %299 = vmatpush2.msra.mxu0 0.0
    %300 = vmatprep.subr.mxu0 0.0
    %301 = vmatpush2.msra.mxu0 0.0
    %302 = vmatprep.subr.mxu0 0.0
    %303 = vmatpush2.msra.mxu0 0.0
    %304 = vmatprep.subr.mxu0 0.0
    %305 = vmatpush2.msra.mxu0 0.0
    %306 = vmatprep.subr.mxu0 0.0
    %307 = vmatpush2.msra.mxu0 0.0
    %308 = vmatprep.subr.mxu0 0.0
    %309 = vmatpush2.msra.mxu0 0.0
    %310 = vmatprep.subr.mxu0 0.0
    %311 = vmatpush2.msra.mxu0 0.0
    %312 = vmatprep.subr.mxu0 0.0
    %313 = vmatpush2.msra.mxu0 0.0
    %314 = vmatprep.subr.mxu0 0.0
    %315 = vmatpush2.msra.mxu0 0.0
    %316 = vmatprep.subr.mxu0 0.0
    %317 = vmatpush2.msra.mxu0 0.0
    %318 = vmatprep.subr.mxu0 0.0
    %319 = vmatpush2.msra.mxu0 0.0
    %320 = vmatprep.mubr.f32.mxu0 0.0
    %321 = vmatmul.mubr.f32.gmra.mxu0 %v254
    %v322 = vpop.f32.mrf.mxu0
    %v323 = vadd.f32 0.0, %v322
    %v324 = vpop.f32.mrf.mxu0
    %325 = vdwg.mxu0
    %v327 = vrot.slane %v323, 7
    %v329 = vadd.f32 %v148, %v327
    %v330 = vxor.u32 %v329, 2147483648
    %v331 = vmul.f32 %v330, 1.442695
    %v332 = vpow.pop %v331
    %v333 = vadd.f32 %v332, 1.0
    %v334 = vrcp.pop %v333
    %v335 = vmul.f32 1.0, %v334
    %v336 = vmul.f32 %v335, 2.0
    %v337 = vsub.f32 %v336, 1.0
    %v339 = vrot.slane %v244, 7
    %v341 = vmul.f32 %v335, %v339
    %343 = vrot.lane.b32.xlu0 %v337, 64
    %v344 = vpop.permute.xlu0 %343
    %v346 = vmul.f32 %v335, %v344
    %348 = vrot.lane.b32.xlu0 %v346, 32
    %v349 = vpop.permute.xlu0 %348
    %v351 = vadd.f32 %v341, %v349
    %v352 = vtanh.pop %v351
    %354 = vrot.lane.b32.xlu0 %v352, 64
    %v355 = vpop.permute.xlu0 %354
    %v357 = vmul.f32 %v335, %v355
    %v359 = vrot.slane %v357, 1
    %360 = vrot.lane.b32.xlu0 %v359, 32
    %v361 = vpop.permute.xlu0 %360
    %v362 = vsel %vm151, %v361, 0
    %364 = vmatprep.subr.mxu0 0.0
    %365 = vmatpush1.msra.mxu0 0.0
    %366 = vmatprep.subr.mxu0 0.0
    %367 = vmatpush1.msra.mxu0 0.0
    %368 = vmatprep.subr.mxu0 0.0
    %369 = vmatpush1.msra.mxu0 0.0
    %370 = vmatprep.subr.mxu0 0.0
    %371 = vmatpush1.msra.mxu0 0.0
    %372 = vmatprep.subr.mxu0 0.0
    %373 = vmatpush1.msra.mxu0 0.0
    %374 = vmatprep.subr.mxu0 0.0
    %375 = vmatpush1.msra.mxu0 0.0
    %376 = vmatprep.subr.mxu0 0.0
    %377 = vmatpush1.msra.mxu0 0.0
    %378 = vmatprep.subr.mxu0 0.0
    %379 = vmatpush1.msra.mxu0 0.0
    %380 = vmatprep.subr.mxu0 0.0
    %381 = vmatpush1.msra.mxu0 0.0
    %382 = vmatprep.subr.mxu0 0.0
    %383 = vmatpush1.msra.mxu0 0.0
    %384 = vmatprep.subr.mxu0 0.0
    %385 = vmatpush1.msra.mxu0 0.0
    %386 = vmatprep.subr.mxu0 0.0
    %387 = vmatpush1.msra.mxu0 0.0
    %388 = vmatprep.subr.mxu0 0.0
    %389 = vmatpush1.msra.mxu0 %v65
    %390 = vmatprep.subr.mxu0 0.0
    %391 = vmatpush1.msra.mxu0 %v64
    %392 = vmatprep.subr.mxu0 0.0
    %393 = vmatpush1.msra.mxu0 %v63
    %394 = vmatprep.subr.mxu0 0.0
    %395 = vmatpush1.msra.mxu0 %v62
    %396 = vmatprep.subr.mxu0 0.0
    %397 = vmatpush2.msra.mxu0 0.0
    %398 = vmatprep.subr.mxu0 0.0
    %399 = vmatpush2.msra.mxu0 0.0
    %400 = vmatprep.subr.mxu0 0.0
    %401 = vmatpush2.msra.mxu0 0.0
    %402 = vmatprep.subr.mxu0 0.0
    %403 = vmatpush2.msra.mxu0 0.0
    %404 = vmatprep.subr.mxu0 0.0
    %405 = vmatpush2.msra.mxu0 0.0
    %406 = vmatprep.subr.mxu0 0.0
    %407 = vmatpush2.msra.mxu0 0.0
    %408 = vmatprep.subr.mxu0 0.0
    %409 = vmatpush2.msra.mxu0 0.0
    %410 = vmatprep.subr.mxu0 0.0
    %411 = vmatpush2.msra.mxu0 0.0
    %412 = vmatprep.subr.mxu0 0.0
    %413 = vmatpush2.msra.mxu0 0.0
    %414 = vmatprep.subr.mxu0 0.0
    %415 = vmatpush2.msra.mxu0 0.0
    %416 = vmatprep.subr.mxu0 0.0
    %417 = vmatpush2.msra.mxu0 0.0
    %418 = vmatprep.subr.mxu0 0.0
    %419 = vmatpush2.msra.mxu0 0.0
    %420 = vmatprep.subr.mxu0 0.0
    %421 = vmatpush2.msra.mxu0 0.0
    %422 = vmatprep.subr.mxu0 0.0
    %423 = vmatpush2.msra.mxu0 0.0
    %424 = vmatprep.subr.mxu0 0.0
    %425 = vmatpush2.msra.mxu0 0.0
    %426 = vmatprep.subr.mxu0 0.0
    %427 = vmatpush2.msra.mxu0 0.0
    %428 = vmatprep.mubr.f32.mxu0 0.0
    %429 = vmatmul.mubr.f32.gmra.mxu0 %v362
    %v430 = vpop.f32.mrf.mxu0
    %v431 = vadd.f32 0.0, %v430
    %v432 = vpop.f32.mrf.mxu0
    %433 = vdwg.mxu0
    %v435 = vrot.slane %v431, 6
    %v437 = vadd.f32 %v148, %v435
    %v438 = vxor.u32 %v437, 2147483648
    %v439 = vmul.f32 %v438, 1.442695
    %v440 = vpow.pop %v439
    %v441 = vadd.f32 %v440, 1.0
    %v442 = vrcp.pop %v441
    %v443 = vmul.f32 1.0, %v442
    %v444 = vmul.f32 %v443, 2.0
    %v445 = vsub.f32 %v444, 1.0
    %v447 = vrot.slane %v351, 7
    %v449 = vmul.f32 %v443, %v447
    %451 = vrot.lane.b32.xlu0 %v445, 64
    %v452 = vpop.permute.xlu0 %451
    %v454 = vmul.f32 %v443, %v452
    %456 = vrot.lane.b32.xlu0 %v454, 32
    %v457 = vpop.permute.xlu0 %456
    %v459 = vadd.f32 %v449, %v457
    %v460 = vtanh.pop %v459
    %462 = vrot.lane.b32.xlu0 %v460, 64
    %v463 = vpop.permute.xlu0 %462
    %v465 = vmul.f32 %v443, %v463
    %v467 = vrot.slane %v465, 2
    %468 = vrot.lane.b32.xlu0 %v467, 32
    %v469 = vpop.permute.xlu0 %468
    %v470 = vsel %vm151, %v469, 0
    %472 = vmatprep.subr.mxu0 0.0
    %473 = vmatpush1.msra.mxu0 0.0
    %474 = vmatprep.subr.mxu0 0.0
    %475 = vmatpush1.msra.mxu0 0.0
    %476 = vmatprep.subr.mxu0 0.0
    %477 = vmatpush1.msra.mxu0 0.0
    %478 = vmatprep.subr.mxu0 0.0
    %479 = vmatpush1.msra.mxu0 0.0
    %480 = vmatprep.subr.mxu0 0.0
    %481 = vmatpush1.msra.mxu0 0.0
    %482 = vmatprep.subr.mxu0 0.0
    %483 = vmatpush1.msra.mxu0 0.0
    %484 = vmatprep.subr.mxu0 0.0
    %485 = vmatpush1.msra.mxu0 0.0
    %486 = vmatprep.subr.mxu0 0.0
    %487 = vmatpush1.msra.mxu0 0.0
    %488 = vmatprep.subr.mxu0 0.0
    %489 = vmatpush1.msra.mxu0 0.0
    %490 = vmatprep.subr.mxu0 0.0
    %491 = vmatpush1.msra.mxu0 0.0
    %492 = vmatprep.subr.mxu0 0.0
    %493 = vmatpush1.msra.mxu0 0.0
    %494 = vmatprep.subr.mxu0 0.0
    %495 = vmatpush1.msra.mxu0 0.0
    %496 = vmatprep.subr.mxu0 0.0
    %497 = vmatpush1.msra.mxu0 %v65
    %498 = vmatprep.subr.mxu0 0.0
    %499 = vmatpush1.msra.mxu0 %v64
    %500 = vmatprep.subr.mxu0 0.0
    %501 = vmatpush1.msra.mxu0 %v63
    %502 = vmatprep.subr.mxu0 0.0
    %503 = vmatpush1.msra.mxu0 %v62
    %504 = vmatprep.subr.mxu0 0.0
    %505 = vmatpush2.msra.mxu0 0.0
    %506 = vmatprep.subr.mxu0 0.0
    %507 = vmatpush2.msra.mxu0 0.0
    %508 = vmatprep.subr.mxu0 0.0
    %509 = vmatpush2.msra.mxu0 0.0
    %510 = vmatprep.subr.mxu0 0.0
    %511 = vmatpush2.msra.mxu0 0.0
    %512 = vmatprep.subr.mxu0 0.0
    %513 = vmatpush2.msra.mxu0 0.0
    %514 = vmatprep.subr.mxu0 0.0
    %515 = vmatpush2.msra.mxu0 0.0
    %516 = vmatprep.subr.mxu0 0.0
    %517 = vmatpush2.msra.mxu0 0.0
    %518 = vmatprep.subr.mxu0 0.0
    %519 = vmatpush2.msra.mxu0 0.0
    %520 = vmatprep.subr.mxu0 0.0
    %521 = vmatpush2.msra.mxu0 0.0
    %522 = vmatprep.subr.mxu0 0.0
    %523 = vmatpush2.msra.mxu0 0.0
    %524 = vmatprep.subr.mxu0 0.0
    %525 = vmatpush2.msra.mxu0 0.0
    %526 = vmatprep.subr.mxu0 0.0
    %527 = vmatpush2.msra.mxu0 0.0
    %528 = vmatprep.subr.mxu0 0.0
    %529 = vmatpush2.msra.mxu0 0.0
    %530 = vmatprep.subr.mxu0 0.0
    %531 = vmatpush2.msra.mxu0 0.0
    %532 = vmatprep.subr.mxu0 0.0
    %533 = vmatpush2.msra.mxu0 0.0
    %534 = vmatprep.subr.mxu0 0.0
    %535 = vmatpush2.msra.mxu0 0.0
    %536 = vmatprep.mubr.f32.mxu0 0.0
    %537 = vmatmul.mubr.f32.gmra.mxu0 %v470
    %v538 = vpop.f32.mrf.mxu0
    %v539 = vadd.f32 0.0, %v538
    %v540 = vpop.f32.mrf.mxu0
    %541 = vdwg.mxu0
    %v543 = vrot.slane %v539, 5
    %v545 = vadd.f32 %v148, %v543
    %v546 = vxor.u32 %v545, 2147483648
    %v547 = vmul.f32 %v546, 1.442695
    %v548 = vpow.pop %v547
    %v549 = vadd.f32 %v548, 1.0
    %v550 = vrcp.pop %v549
    %v551 = vmul.f32 1.0, %v550
    %v552 = vmul.f32 %v551, 2.0
    %v553 = vsub.f32 %v552, 1.0
    %v555 = vrot.slane %v459, 7
    %v557 = vmul.f32 %v551, %v555
    %559 = vrot.lane.b32.xlu0 %v553, 64
    %v560 = vpop.permute.xlu0 %559
    %v562 = vmul.f32 %v551, %v560
    %564 = vrot.lane.b32.xlu0 %v562, 32
    %v565 = vpop.permute.xlu0 %564
    %v567 = vadd.f32 %v557, %v565
    %v568 = vtanh.pop %v567
    %570 = vrot.lane.b32.xlu0 %v568, 64
    %v571 = vpop.permute.xlu0 %570
    %v573 = vmul.f32 %v551, %v571
    %v575 = vrot.slane %v573, 3
    %576 = vrot.lane.b32.xlu0 %v575, 32
    %v577 = vpop.permute.xlu0 %576
    %v578 = vsel %vm151, %v577, 0
    %580 = vmatprep.subr.mxu0 0.0
    %581 = vmatpush1.msra.mxu0 0.0
    %582 = vmatprep.subr.mxu0 0.0
    %583 = vmatpush1.msra.mxu0 0.0
    %584 = vmatprep.subr.mxu0 0.0
    %585 = vmatpush1.msra.mxu0 0.0
    %586 = vmatprep.subr.mxu0 0.0
    %587 = vmatpush1.msra.mxu0 0.0
    %588 = vmatprep.subr.mxu0 0.0
    %589 = vmatpush1.msra.mxu0 0.0
    %590 = vmatprep.subr.mxu0 0.0
    %591 = vmatpush1.msra.mxu0 0.0
    %592 = vmatprep.subr.mxu0 0.0
    %593 = vmatpush1.msra.mxu0 0.0
    %594 = vmatprep.subr.mxu0 0.0
    %595 = vmatpush1.msra.mxu0 0.0
    %596 = vmatprep.subr.mxu0 0.0
    %597 = vmatpush1.msra.mxu0 0.0
    %598 = vmatprep.subr.mxu0 0.0
    %599 = vmatpush1.msra.mxu0 0.0
    %600 = vmatprep.subr.mxu0 0.0
    %601 = vmatpush1.msra.mxu0 0.0
    %602 = vmatprep.subr.mxu0 0.0
    %603 = vmatpush1.msra.mxu0 0.0
    %604 = vmatprep.subr.mxu0 0.0
    %605 = vmatpush1.msra.mxu0 %v65
    %606 = vmatprep.subr.mxu0 0.0
    %607 = vmatpush1.msra.mxu0 %v64
    %608 = vmatprep.subr.mxu0 0.0
    %609 = vmatpush1.msra.mxu0 %v63
    %610 = vmatprep.subr.mxu0 0.0
    %611 = vmatpush1.msra.mxu0 %v62
    %612 = vmatprep.subr.mxu0 0.0
    %613 = vmatpush2.msra.mxu0 0.0
    %614 = vmatprep.subr.mxu0 0.0
    %615 = vmatpush2.msra.mxu0 0.0
    %616 = vmatprep.subr.mxu0 0.0
    %617 = vmatpush2.msra.mxu0 0.0
    %618 = vmatprep.subr.mxu0 0.0
    %619 = vmatpush2.msra.mxu0 0.0
    %620 = vmatprep.subr.mxu0 0.0
    %621 = vmatpush2.msra.mxu0 0.0
    %622 = vmatprep.subr.mxu0 0.0
    %623 = vmatpush2.msra.mxu0 0.0
    %624 = vmatprep.subr.mxu0 0.0
    %625 = vmatpush2.msra.mxu0 0.0
    %626 = vmatprep.subr.mxu0 0.0
    %627 = vmatpush2.msra.mxu0 0.0
    %628 = vmatprep.subr.mxu0 0.0
    %629 = vmatpush2.msra.mxu0 0.0
    %630 = vmatprep.subr.mxu0 0.0
    %631 = vmatpush2.msra.mxu0 0.0
    %632 = vmatprep.subr.mxu0 0.0
    %633 = vmatpush2.msra.mxu0 0.0
    %634 = vmatprep.subr.mxu0 0.0
    %635 = vmatpush2.msra.mxu0 0.0
    %636 = vmatprep.subr.mxu0 0.0
    %637 = vmatpush2.msra.mxu0 0.0
    %638 = vmatprep.subr.mxu0 0.0
    %639 = vmatpush2.msra.mxu0 0.0
    %640 = vmatprep.subr.mxu0 0.0
    %641 = vmatpush2.msra.mxu0 0.0
    %642 = vmatprep.subr.mxu0 0.0
    %643 = vmatpush2.msra.mxu0 0.0
    %644 = vmatprep.mubr.f32.mxu0 0.0
    %645 = vmatmul.mubr.f32.gmra.mxu0 %v578
    %v646 = vpop.f32.mrf.mxu0
    %v647 = vadd.f32 0.0, %v646
    %v648 = vpop.f32.mrf.mxu0
    %649 = vdwg.mxu0
    %v651 = vrot.slane %v647, 4
    %v653 = vadd.f32 %v148, %v651
    %v654 = vxor.u32 %v653, 2147483648
    %v655 = vmul.f32 %v654, 1.442695
    %v656 = vpow.pop %v655
    %v657 = vadd.f32 %v656, 1.0
    %v658 = vrcp.pop %v657
    %v659 = vmul.f32 1.0, %v658
    %v660 = vmul.f32 %v659, 2.0
    %v661 = vsub.f32 %v660, 1.0
    %v663 = vrot.slane %v567, 7
    %v665 = vmul.f32 %v659, %v663
    %667 = vrot.lane.b32.xlu0 %v661, 64
    %v668 = vpop.permute.xlu0 %667
    %v670 = vmul.f32 %v659, %v668
    %672 = vrot.lane.b32.xlu0 %v670, 32
    %v673 = vpop.permute.xlu0 %672
    %v675 = vadd.f32 %v665, %v673
    %v676 = vtanh.pop %v675
    %678 = vrot.lane.b32.xlu0 %v676, 64
    %v679 = vpop.permute.xlu0 %678
    %v681 = vmul.f32 %v659, %v679
    %v683 = vrot.slane %v681, 4
    %684 = vrot.lane.b32.xlu0 %v683, 32
    %v685 = vpop.permute.xlu0 %684
    %v686 = vsel %vm151, %v685, 0
    %688 = vmatprep.subr.mxu0 0.0
    %689 = vmatpush1.msra.mxu0 0.0
    %690 = vmatprep.subr.mxu0 0.0
    %691 = vmatpush1.msra.mxu0 0.0
    %692 = vmatprep.subr.mxu0 0.0
    %693 = vmatpush1.msra.mxu0 0.0
    %694 = vmatprep.subr.mxu0 0.0
    %695 = vmatpush1.msra.mxu0 0.0
    %696 = vmatprep.subr.mxu0 0.0
    %697 = vmatpush1.msra.mxu0 0.0
    %698 = vmatprep.subr.mxu0 0.0
    %699 = vmatpush1.msra.mxu0 0.0
    %700 = vmatprep.subr.mxu0 0.0
    %701 = vmatpush1.msra.mxu0 0.0
    %702 = vmatprep.subr.mxu0 0.0
    %703 = vmatpush1.msra.mxu0 0.0
    %704 = vmatprep.subr.mxu0 0.0
    %705 = vmatpush1.msra.mxu0 0.0
    %706 = vmatprep.subr.mxu0 0.0
    %707 = vmatpush1.msra.mxu0 0.0
    %708 = vmatprep.subr.mxu0 0.0
    %709 = vmatpush1.msra.mxu0 0.0
    %710 = vmatprep.subr.mxu0 0.0
    %711 = vmatpush1.msra.mxu0 0.0
    %712 = vmatprep.subr.mxu0 0.0
    %713 = vmatpush1.msra.mxu0 %v65
    %714 = vmatprep.subr.mxu0 0.0
    %715 = vmatpush1.msra.mxu0 %v64
    %716 = vmatprep.subr.mxu0 0.0
    %717 = vmatpush1.msra.mxu0 %v63
    %718 = vmatprep.subr.mxu0 0.0
    %719 = vmatpush1.msra.mxu0 %v62
    %720 = vmatprep.subr.mxu0 0.0
    %721 = vmatpush2.msra.mxu0 0.0
    %722 = vmatprep.subr.mxu0 0.0
    %723 = vmatpush2.msra.mxu0 0.0
    %724 = vmatprep.subr.mxu0 0.0
    %725 = vmatpush2.msra.mxu0 0.0
    %726 = vmatprep.subr.mxu0 0.0
    %727 = vmatpush2.msra.mxu0 0.0
    %728 = vmatprep.subr.mxu0 0.0
    %729 = vmatpush2.msra.mxu0 0.0
    %730 = vmatprep.subr.mxu0 0.0
    %731 = vmatpush2.msra.mxu0 0.0
    %732 = vmatprep.subr.mxu0 0.0
    %733 = vmatpush2.msra.mxu0 0.0
    %734 = vmatprep.subr.mxu0 0.0
    %735 = vmatpush2.msra.mxu0 0.0
    %736 = vmatprep.subr.mxu0 0.0
    %737 = vmatpush2.msra.mxu0 0.0
    %738 = vmatprep.subr.mxu0 0.0
    %739 = vmatpush2.msra.mxu0 0.0
    %740 = vmatprep.subr.mxu0 0.0
    %741 = vmatpush2.msra.mxu0 0.0
    %742 = vmatprep.subr.mxu0 0.0
    %743 = vmatpush2.msra.mxu0 0.0
    %744 = vmatprep.subr.mxu0 0.0
    %745 = vmatpush2.msra.mxu0 0.0
    %746 = vmatprep.subr.mxu0 0.0
    %747 = vmatpush2.msra.mxu0 0.0
    %748 = vmatprep.subr.mxu0 0.0
    %749 = vmatpush2.msra.mxu0 0.0
    %750 = vmatprep.subr.mxu0 0.0
    %751 = vmatpush2.msra.mxu0 0.0
    %752 = vmatprep.mubr.f32.mxu0 0.0
    %753 = vmatmul.mubr.f32.gmra.mxu0 %v686
    %v754 = vpop.f32.mrf.mxu0
    %v755 = vadd.f32 0.0, %v754
    %v756 = vpop.f32.mrf.mxu0
    %757 = vdwg.mxu0
    %v759 = vrot.slane %v755, 3
    %v761 = vadd.f32 %v148, %v759
    %v762 = vxor.u32 %v761, 2147483648
    %v763 = vmul.f32 %v762, 1.442695
    %v764 = vpow.pop %v763
    %v765 = vadd.f32 %v764, 1.0
    %v766 = vrcp.pop %v765
    %v767 = vmul.f32 1.0, %v766
    %v768 = vmul.f32 %v767, 2.0
    %v769 = vsub.f32 %v768, 1.0
    %v771 = vrot.slane %v675, 7
    %v773 = vmul.f32 %v767, %v771
    %775 = vrot.lane.b32.xlu0 %v769, 64
    %v776 = vpop.permute.xlu0 %775
    %v778 = vmul.f32 %v767, %v776
    %780 = vrot.lane.b32.xlu0 %v778, 32
    %v781 = vpop.permute.xlu0 %780
    %v783 = vadd.f32 %v773, %v781
    %v784 = vtanh.pop %v783
    %786 = vrot.lane.b32.xlu0 %v784, 64
    %v787 = vpop.permute.xlu0 %786
    %v789 = vmul.f32 %v767, %v787
    %v791 = vrot.slane %v789, 5
    %792 = vrot.lane.b32.xlu0 %v791, 32
    %v793 = vpop.permute.xlu0 %792
    %v794 = vsel %vm151, %v793, 0
    %796 = vmatprep.subr.mxu0 0.0
    %797 = vmatpush1.msra.mxu0 0.0
    %798 = vmatprep.subr.mxu0 0.0
    %799 = vmatpush1.msra.mxu0 0.0
    %800 = vmatprep.subr.mxu0 0.0
    %801 = vmatpush1.msra.mxu0 0.0
    %802 = vmatprep.subr.mxu0 0.0
    %803 = vmatpush1.msra.mxu0 0.0
    %804 = vmatprep.subr.mxu0 0.0
    %805 = vmatpush1.msra.mxu0 0.0
    %806 = vmatprep.subr.mxu0 0.0
    %807 = vmatpush1.msra.mxu0 0.0
    %808 = vmatprep.subr.mxu0 0.0
    %809 = vmatpush1.msra.mxu0 0.0
    %810 = vmatprep.subr.mxu0 0.0
    %811 = vmatpush1.msra.mxu0 0.0
    %812 = vmatprep.subr.mxu0 0.0
    %813 = vmatpush1.msra.mxu0 0.0
    %814 = vmatprep.subr.mxu0 0.0
    %815 = vmatpush1.msra.mxu0 0.0
    %816 = vmatprep.subr.mxu0 0.0
    %817 = vmatpush1.msra.mxu0 0.0
    %818 = vmatprep.subr.mxu0 0.0
    %819 = vmatpush1.msra.mxu0 0.0
    %820 = vmatprep.subr.mxu0 0.0
    %821 = vmatpush1.msra.mxu0 %v65
    %822 = vmatprep.subr.mxu0 0.0
    %823 = vmatpush1.msra.mxu0 %v64
    %824 = vmatprep.subr.mxu0 0.0
    %825 = vmatpush1.msra.mxu0 %v63
    %826 = vmatprep.subr.mxu0 0.0
    %827 = vmatpush1.msra.mxu0 %v62
    %828 = vmatprep.subr.mxu0 0.0
    %829 = vmatpush2.msra.mxu0 0.0
    %830 = vmatprep.subr.mxu0 0.0
    %831 = vmatpush2.msra.mxu0 0.0
    %832 = vmatprep.subr.mxu0 0.0
    %833 = vmatpush2.msra.mxu0 0.0
    %834 = vmatprep.subr.mxu0 0.0
    %835 = vmatpush2.msra.mxu0 0.0
    %836 = vmatprep.subr.mxu0 0.0
    %837 = vmatpush2.msra.mxu0 0.0
    %838 = vmatprep.subr.mxu0 0.0
    %839 = vmatpush2.msra.mxu0 0.0
    %840 = vmatprep.subr.mxu0 0.0
    %841 = vmatpush2.msra.mxu0 0.0
    %842 = vmatprep.subr.mxu0 0.0
    %843 = vmatpush2.msra.mxu0 0.0
    %844 = vmatprep.subr.mxu0 0.0
    %845 = vmatpush2.msra.mxu0 0.0
    %846 = vmatprep.subr.mxu0 0.0
    %847 = vmatpush2.msra.mxu0 0.0
    %848 = vmatprep.subr.mxu0 0.0
    %849 = vmatpush2.msra.mxu0 0.0
    %850 = vmatprep.subr.mxu0 0.0
    %851 = vmatpush2.msra.mxu0 0.0
    %852 = vmatprep.subr.mxu0 0.0
    %853 = vmatpush2.msra.mxu0 0.0
    %854 = vmatprep.subr.mxu0 0.0
    %855 = vmatpush2.msra.mxu0 0.0
    %856 = vmatprep.subr.mxu0 0.0
    %857 = vmatpush2.msra.mxu0 0.0
    %858 = vmatprep.subr.mxu0 0.0
    %859 = vmatpush2.msra.mxu0 0.0
    %860 = vmatprep.mubr.f32.mxu0 0.0
    %861 = vmatmul.mubr.f32.gmra.mxu0 %v794
    %v862 = vpop.f32.mrf.mxu0
    %v863 = vadd.f32 0.0, %v862
    %v864 = vpop.f32.mrf.mxu0
    %865 = vdwg.mxu0
    %v867 = vrot.slane %v863, 2
    %v869 = vadd.f32 %v148, %v867
    %v870 = vxor.u32 %v869, 2147483648
    %v871 = vmul.f32 %v870, 1.442695
    %v872 = vpow.pop %v871
    %v873 = vadd.f32 %v872, 1.0
    %v874 = vrcp.pop %v873
    %v875 = vmul.f32 1.0, %v874
    %v876 = vmul.f32 %v875, 2.0
    %v877 = vsub.f32 %v876, 1.0
    %v879 = vrot.slane %v783, 7
    %v881 = vmul.f32 %v875, %v879
    %883 = vrot.lane.b32.xlu0 %v877, 64
    %v884 = vpop.permute.xlu0 %883
    %v886 = vmul.f32 %v875, %v884
    %888 = vrot.lane.b32.xlu0 %v886, 32
    %v889 = vpop.permute.xlu0 %888
    %v891 = vadd.f32 %v881, %v889
    %v892 = vtanh.pop %v891
    %894 = vrot.lane.b32.xlu0 %v892, 64
    %v895 = vpop.permute.xlu0 %894
    %v897 = vmul.f32 %v875, %v895
    %v899 = vrot.slane %v897, 6
    %900 = vrot.lane.b32.xlu0 %v899, 32
    %v901 = vpop.permute.xlu0 %900
    %v902 = vsel %vm151, %v901, 0
    %904 = vmatprep.subr.mxu0 0.0
    %905 = vmatpush1.msra.mxu0 0.0
    %906 = vmatprep.subr.mxu0 0.0
    %907 = vmatpush1.msra.mxu0 0.0
    %908 = vmatprep.subr.mxu0 0.0
    %909 = vmatpush1.msra.mxu0 0.0
    %910 = vmatprep.subr.mxu0 0.0
    %911 = vmatpush1.msra.mxu0 0.0
    %912 = vmatprep.subr.mxu0 0.0
    %913 = vmatpush1.msra.mxu0 0.0
    %914 = vmatprep.subr.mxu0 0.0
    %915 = vmatpush1.msra.mxu0 0.0
    %916 = vmatprep.subr.mxu0 0.0
    %917 = vmatpush1.msra.mxu0 0.0
    %918 = vmatprep.subr.mxu0 0.0
    %919 = vmatpush1.msra.mxu0 0.0
    %920 = vmatprep.subr.mxu0 0.0
    %921 = vmatpush1.msra.mxu0 0.0
    %922 = vmatprep.subr.mxu0 0.0
    %923 = vmatpush1.msra.mxu0 0.0
    %924 = vmatprep.subr.mxu0 0.0
    %925 = vmatpush1.msra.mxu0 0.0
    %926 = vmatprep.subr.mxu0 0.0
    %927 = vmatpush1.msra.mxu0 0.0
    %928 = vmatprep.subr.mxu0 0.0
    %929 = vmatpush1.msra.mxu0 %v65
    %930 = vmatprep.subr.mxu0 0.0
    %931 = vmatpush1.msra.mxu0 %v64
    %932 = vmatprep.subr.mxu0 0.0
    %933 = vmatpush1.msra.mxu0 %v63
    %934 = vmatprep.subr.mxu0 0.0
    %935 = vmatpush1.msra.mxu0 %v62
    %936 = vmatprep.subr.mxu0 0.0
    %937 = vmatpush2.msra.mxu0 0.0
    %938 = vmatprep.subr.mxu0 0.0
    %939 = vmatpush2.msra.mxu0 0.0
    %940 = vmatprep.subr.mxu0 0.0
    %941 = vmatpush2.msra.mxu0 0.0
    %942 = vmatprep.subr.mxu0 0.0
    %943 = vmatpush2.msra.mxu0 0.0
    %944 = vmatprep.subr.mxu0 0.0
    %945 = vmatpush2.msra.mxu0 0.0
    %946 = vmatprep.subr.mxu0 0.0
    %947 = vmatpush2.msra.mxu0 0.0
    %948 = vmatprep.subr.mxu0 0.0
    %949 = vmatpush2.msra.mxu0 0.0
    %950 = vmatprep.subr.mxu0 0.0
    %951 = vmatpush2.msra.mxu0 0.0
    %952 = vmatprep.subr.mxu0 0.0
    %953 = vmatpush2.msra.mxu0 0.0
    %954 = vmatprep.subr.mxu0 0.0
    %955 = vmatpush2.msra.mxu0 0.0
    %956 = vmatprep.subr.mxu0 0.0
    %957 = vmatpush2.msra.mxu0 0.0
    %958 = vmatprep.subr.mxu0 0.0
    %959 = vmatpush2.msra.mxu0 0.0
    %960 = vmatprep.subr.mxu0 0.0
    %961 = vmatpush2.msra.mxu0 0.0
    %962 = vmatprep.subr.mxu0 0.0
    %963 = vmatpush2.msra.mxu0 0.0
    %964 = vmatprep.subr.mxu0 0.0
    %965 = vmatpush2.msra.mxu0 0.0
    %966 = vmatprep.subr.mxu0 0.0
    %967 = vmatpush2.msra.mxu0 0.0
    %968 = vmatprep.mubr.f32.mxu0 0.0
    %969 = vmatmul.mubr.f32.gmra.mxu0 %v902
    %v970 = vpop.f32.mrf.mxu0
    %v971 = vadd.f32 0.0, %v970
    %v972 = vpop.f32.mrf.mxu0
    %973 = vdwg.mxu0
    %v975 = vrot.slane %v971, 1
    %v977 = vadd.f32 %v148, %v975
    %v978 = vxor.u32 %v977, 2147483648
    %v979 = vmul.f32 %v978, 1.442695
    %v980 = vpow.pop %v979
    %v981 = vadd.f32 %v980, 1.0
    %v982 = vrcp.pop %v981
    %v983 = vmul.f32 1.0, %v982
    %v984 = vmul.f32 %v983, 2.0
    %v985 = vsub.f32 %v984, 1.0
    %v987 = vrot.slane %v891, 7
    %v989 = vmul.f32 %v983, %v987
    %991 = vrot.lane.b32.xlu0 %v985, 64
    %v992 = vpop.permute.xlu0 %991
    %v994 = vmul.f32 %v983, %v992
    %996 = vrot.lane.b32.xlu0 %v994, 32
    %v997 = vpop.permute.xlu0 %996
    %v999 = vadd.f32 %v989, %v997
    %v1000 = vtanh.pop %v999
    %1002 = vrot.lane.b32.xlu0 %v1000, 64
    %v1003 = vpop.permute.xlu0 %1002
    %v1005 = vmul.f32 %v983, %v1003
    %vm1006 = vcmask 1040384
    %v1007 = vsel %vm1006, %v250, %v357
    %vm1008 = vcmask 1041408
    %v1009 = vsel %vm1008, %v1007, %v465
    %vm1010 = vcmask 1042432
    %v1011 = vsel %vm1010, %v1009, %v573
    %vm1012 = vcmask 1043456
    %v1013 = vsel %vm1012, %v1011, %v681
    %vm1014 = vcmask 1044480
    %v1015 = vsel %vm1014, %v1013, %v789
    %vm1016 = vcmask 1045504
    %v1017 = vsel %vm1016, %v1015, %v897
    %vm1018 = vcmask 1046528
    %v1019 = vsel %vm1018, %v1017, %v1005
    %v1021 = vlaneseq
    %v1022 = vshrl.u32 %v1021, 7
    %v1023 = vsub.s32 0, %v1022
    %v1024 = vrot.slane %v66, %v1023
    %1025 = vrot.lane.b32.xlu0 %v1024, 96
    %v1026 = vpop.permute.xlu0 %1025
    %v1028 = vmul.f32 %v1019, %v1026
    %1030 = vrot.lane.b32.xlu0 %v1028, 32
    %v1031 = vpop.permute.xlu0 %1030
    %v1033 = vsel %vm151, %v1031, 0.0
    %1034 = vadd.xlane.f32.xlu0 %v1033
    %v1035 = vpop.xlane.xlu0 %1034
    %v1037 = vlaneseq
    %v1038 = vshrl.u32 %v1037, 7
    %v1039 = vsub.s32 0, %v1038
    %v1040 = vrot.slane %v67, %v1039
    %v1042 = vadd.f32 %v1035, %v1040
    %vm1043 = vcmask 7168
    %1044 = vst.msk [vmem:[%s6] sm:$0xff] %vm1043, %v1042
    // Predicated region
    $region38: #{tpu_custom_call.1} parent=1 // pred_check
      _
    $region39: #{tpu_custom_call.1} parent=1 // pred_check_branch
      %1046 = sbr.rel (0) target = $region41
    $region40: #{tpu_custom_call.1} parent=1 // pred_region
      _
    $region41: #{tpu_custom_call.1} parent=1 // pred_fallthru
      _
    // Predicated region
    $region42: #{tpu_custom_call.1} parent=1 // pred_check
      _
    $region43: #{tpu_custom_call.1} parent=1 // pred_check_branch
      %1048 = sbr.rel (0) target = $region45
    $region44: #{tpu_custom_call.1} parent=1 // pred_region
      _
    $region45: #{tpu_custom_call.1} parent=1 // pred_fallthru
      _
    %1049 = vsyncpa [#allocation4], 1
    %1050 = vsyncpa [#allocation6], 1

</llo_original>
